<compile_context>
chip_gen: v7x
topology: tpu7x:2x2x1
jax: 0.10.0
libtpu: 0.0.40
codegen_flags: <defaults>
</compile_context>

<pallas_src>
import functools

import jax
import jax.numpy as jnp
from jax.experimental import pallas as pl
from jax.experimental.pallas import tpu as pltpu


_TARGET_BLOCK_BYTES = 2 << 20   # ~2 MiB input blocks: past the ~85% HBM-roofline knee,
                                # and 2*(in+out) double-buffered stays ~8 MiB.
_LANE_GRANULE = 128             # channel tiles stay multiples of 128 -> lane-dense vst.


def _num_tensorcores() -> int:
    """Best-effort TensorCores-per-chip: 2 on v7x, 1 on v5e/v6e (and on failure)."""
    try:
        kind = jax.devices()[0].device_kind.lower()
    except Exception:
        return 1
    if "v7" in kind or "7x" in kind:
        return 2
    return 1


def _pick_tiles(B, N, C, itemsize, num_cores):
    """Choose (batch_tile, channel_tile) for input blocks of shape (bt, N, ct)."""
    total_bytes = B * N * C * itemsize
    if total_bytes >= 4 * _TARGET_BLOCK_BYTES:
        # Big problem: enough steps for pipelining and (on v7x) a cross-core split.
        want_steps = max(4, 2 * num_cores)
    elif total_bytes >= (512 << 10):
        want_steps = 2          # at least overlap DMA-in with DMA-out
    else:
        want_steps = 1          # tiny problem: per-step overhead would dominate

    # Channel-tile candidates: full C first (fewest steps), then descending
    # multiples of 128.  A ragged last channel block (C % ct != 0) is masked/legal.
    if C <= _LANE_GRANULE:
        candidates = [C]
    else:
        candidates = [C] + [
            k * _LANE_GRANULE for k in range((C - 1) // _LANE_GRANULE, 0, -1)
        ]

    for ct in candidates:
        row_bytes = N * ct * itemsize
        bt = max(1, min(B, _TARGET_BLOCK_BYTES // row_bytes))
        steps = pl.cdiv(B, bt) * pl.cdiv(C, ct)
        if bt * row_bytes <= _TARGET_BLOCK_BYTES and steps >= want_steps:
            return int(bt), int(ct)

    # Fallback: smallest lane-dense block.  Either the problem is tiny (fewer steps
    # than wanted is fine) or N is huge (vmem_limit_bytes handles the footprint).
    ct = candidates[-1]
    bt = max(1, min(B, _TARGET_BLOCK_BYTES // (N * ct * itemsize)))
    return int(bt), int(ct)


def _readout_kernel(x_ref, o_ref, *, start_index: int):
    # x_ref: (bt, N, ct) input block; o_ref: (bt, out_tokens, ct) output block.
    out_tokens = o_ref.shape[1]
    if start_index == 2:
        readout = (x_ref[:, 0, :] + x_ref[:, 1, :]) * 0.5   # (bt, ct)
    else:
        readout = x_ref[:, 0, :]                            # (bt, ct)
    # Static sublane-offset load of the patch tokens; add + store then write a
    # (bt, out_tokens, ct) slab exactly aligned to the output block.
    patches = x_ref[:, pl.ds(start_index, out_tokens), :]
    o_ref[...] = patches + readout[:, None, :]


def readout_pallas(x: jnp.ndarray, start_index: int = 1, *,
                   block_batch: int | None = None,
                   block_channels: int | None = None) -> jnp.ndarray:
    """Pallas equivalent of Readout.forward. x: [B, N, C] -> [B, N-start_index, C].

    block_batch / block_channels override the automatic tile picker (used by the
    tests to exercise ragged batch / channel edge blocks at small shapes; overrides
    for the channel tile should be multiples of 128 or equal to C).
    """
    if start_index not in (1, 2):
        raise ValueError("start_index must be 1 or 2")
    B, N, C = x.shape
    if N <= start_index:
        raise ValueError("need at least start_index + 1 tokens")
    out_tokens = N - start_index
    itemsize = jnp.dtype(x.dtype).itemsize

    num_cores = _num_tensorcores()
    bt, ct = _pick_tiles(B, N, C, itemsize, num_cores)
    if block_batch is not None:
        bt = max(1, min(B, int(block_batch)))
    if block_channels is not None:
        ct = max(1, min(C, int(block_channels)))

    gb, gc = pl.cdiv(B, bt), pl.cdiv(C, ct)

    # Grid order: batch-major unless only the channel axis can be split across the
    # TensorCores of a multi-core chip (v7x), in which case go channel-major.
    channel_leading = (
        num_cores >= 2
        and not (gb >= num_cores and gb % num_cores == 0)
        and (gc >= num_cores and gc % num_cores == 0)
    )
    if channel_leading:
        grid = (gc, gb)
        index_map = lambda c, b: (b, 0, c)
    else:
        grid = (gb, gc)
        index_map = lambda b, c: (b, 0, c)

    dim_sem = [pltpu.PARALLEL, pltpu.PARALLEL]
    if num_cores >= 2 and grid[0] >= num_cores and grid[0] % num_cores == 0:
        # Guarantee the cross-core split on multi-TensorCore parts (v7x).
        dim_sem[0] = pltpu.CORE_PARALLEL

    # Double-buffered in + out footprint; raise the scoped-VMEM limit only when a
    # pathological shape (huge N) actually needs it, clamped safely under v7x's
    # 64 MiB per-core physical VMEM.
    in_block_bytes = bt * N * ct * itemsize
    out_block_bytes = bt * out_tokens * ct * itemsize
    footprint = 2 * (in_block_bytes + out_block_bytes)
    vmem_limit = None
    if footprint > (12 << 20):
        vmem_limit = min(int(footprint * 1.25) + (2 << 20), 48 << 20)

    kernel = functools.partial(_readout_kernel, start_index=start_index)

    flops = B * out_tokens * C + (2 * B * C if start_index == 2 else 0)
    bytes_accessed = (B * N * C + B * out_tokens * C) * itemsize

    return pl.pallas_call(
        kernel,
        out_shape=jax.ShapeDtypeStruct((B, out_tokens, C), x.dtype),
        grid=grid,
        in_specs=[pl.BlockSpec((bt, N, ct), index_map)],
        out_specs=pl.BlockSpec((bt, out_tokens, ct), index_map),
        compiler_params=pltpu.CompilerParams(
            dimension_semantics=tuple(dim_sem),
            vmem_limit_bytes=vmem_limit),
        cost_estimate=pl.CostEstimate(
            flops=flops, transcendentals=0, bytes_accessed=bytes_accessed),
    )(x)


def readout_reference(x: jnp.ndarray, start_index: int = 1) -> jnp.ndarray:
    if start_index == 2:
        readout = (x[:, 0] + x[:, 1]) / 2
    else:
        readout = x[:, 0]
    return x[:, start_index:] + readout[:, None, :]


if __name__ == "__main__":
    root = jax.random.PRNGKey(0)
    k0, k1, k2, k3 = jax.random.split(root, 4)

    # Case 1: toy ViT block (8 patch tokens + CLS, hidden=32), start_index=1 and 2,
    # automatic tiling (single block).
    B, N, C = 2, 9, 32
    x = jax.random.normal(k0, (B, N, C), dtype=jnp.float32)
    out1 = jax.block_until_ready(readout_pallas(x, start_index=1))
    assert out1.shape == (B, N - 1, C)
    assert jnp.allclose(out1, readout_reference(x, start_index=1), atol=1e-6, rtol=1e-6)
    out2 = jax.block_until_ready(readout_pallas(x, start_index=2))
    assert out2.shape == (B, N - 2, C)
    assert jnp.allclose(out2, readout_reference(x, start_index=2), atol=1e-6, rtol=1e-6)

    # Case 2: batch not divisible by the batch tile (forced) -> masked batch edge block.
    x3 = jax.random.normal(k1, (3, 9, 32), dtype=jnp.float32)
    out3 = jax.block_until_ready(readout_pallas(x3, start_index=1, block_batch=2))
    assert out3.shape == (3, 8, 32)
    assert jnp.allclose(out3, readout_reference(x3, start_index=1), atol=1e-6, rtol=1e-6)

    # Case 3: B == 1 with a 128-aligned channel axis, forced channel tiling
    # (grid (1, 2), lane-dense stores).
    x4 = jax.random.normal(k2, (1, 17, 256), dtype=jnp.float32)
    out4 = jax.block_until_ready(readout_pallas(x4, start_index=1, block_channels=128))
    assert out4.shape == (1, 16, 256)
    assert jnp.allclose(out4, readout_reference(x4, start_index=1), atol=1e-6, rtol=1e-6)

    # Case 4: C not a multiple of the channel tile -> ragged/masked channel edge block,
    # with start_index=2 (CLS+DIST average).
    x5 = jax.random.normal(k3, (2, 9, 160), dtype=jnp.float32)
    out5 = jax.block_until_ready(
        readout_pallas(x5, start_index=2, block_batch=1, block_channels=128))
    assert out5.shape == (2, 7, 160)
    assert jnp.allclose(out5, readout_reference(x5, start_index=2), atol=1e-6, rtol=1e-6)

    print("KERNEL_OK")
</pallas_src>

<mosaic_0001>
module attributes {stable_mosaic.version = 11 : i64} {
  func.func @_readout_kernel(%arg0: i32, %arg1: i32, %arg2: memref<2x9x32xf32, #tpu.memory_space<vmem>>, %arg3: memref<2x8x32xf32, #tpu.memory_space<vmem>>) attributes {dimension_semantics = [#tpu.dimension_semantics<parallel>, #tpu.dimension_semantics<parallel>], iteration_bounds = array<i64: 1, 1>, scalar_prefetch = 0 : i64, scratch_operands = 0 : i64, tpu.core_type = #tpu.core_type<tc>, window_params = [{transform_indices = @transform_0, window_bounds = array<i64: 2, 9, 32>}, {transform_indices = @transform_1, window_bounds = array<i64: 2, 8, 32>}]} {
    %c0 = arith.constant 0 : index
    %c0_0 = arith.constant 0 : index
    %c0_1 = arith.constant 0 : index
    %0 = vector.load %arg2[%c0, %c0_0, %c0_1] : memref<2x9x32xf32, #tpu.memory_space<vmem>>, vector<2x1x32xf32>
    %1 = vector.shape_cast %0 : vector<2x1x32xf32> to vector<2x32xf32>
    %c0_2 = arith.constant 0 : index
    %c1 = arith.constant 1 : index
    %c0_3 = arith.constant 0 : index
    %2 = vector.load %arg2[%c0_2, %c1, %c0_3] : memref<2x9x32xf32, #tpu.memory_space<vmem>>, vector<2x8x32xf32>
    %3 = vector.shape_cast %1 : vector<2x32xf32> to vector<2x1x32xf32>
    %4 = vector.broadcast %3 : vector<2x1x32xf32> to vector<2x8x32xf32>
    %5 = arith.addf %2, %4 : vector<2x8x32xf32>
    %c0_4 = arith.constant 0 : index
    %c0_5 = arith.constant 0 : index
    %c0_6 = arith.constant 0 : index
    %6 = vector.load %arg3[%c0_4, %c0_5, %c0_6] : memref<2x8x32xf32, #tpu.memory_space<vmem>>, vector<2x8x32xf32>
    tpu.vector_store %arg3[%c0_4, %c0_5, %c0_6], %5 {strides = array<i32>} : memref<2x8x32xf32, #tpu.memory_space<vmem>>, vector<2x8x32xf32>,
    return
  }
  func.func @transform_0(%arg0: i32, %arg1: i32) -> (i32, i32, i32) {
    %c0_i32 = arith.constant 0 : i32
    %c0_i32_0 = arith.constant 0 : i32
    return %arg0, %c0_i32, %arg1 : i32, i32, i32
  }
  func.func @transform_1(%arg0: i32, %arg1: i32) -> (i32, i32, i32) {
    %c0_i32 = arith.constant 0 : i32
    %c0_i32_0 = arith.constant 0 : i32
    return %arg0, %c0_i32, %arg1 : i32, i32, i32
  }
}

</mosaic_0001>

<llo_original>
// kernel: tpu_custom_call.1
$region0: #{tpu_custom_call.1}
  #allocation0 [shape = 'u32[]', space=smem, size = 0x4, offset = 0x4, fixed_abs, tag = 'smem constant byte address 0x4 - core index']
  #allocation1 [shape = 'u32[144,128]{1,0:T(1,128)}', space=vmem, size = 0x12000, scoped, tag = 'internal scratch']
  %s0 = inlined_call_operand.vmem [shape: f32[2,9,32], index: 0, kind: input, shape index: {}]
  %s1 = inlined_call_operand.hbm [shape: f32[2,8,32], index: 1, kind: output, shape index: {}]
  %s2 = sld [smem:[#allocation0]]
  $region14: #{tpu_custom_call.1} parent=0
    _
  %s4 = ssub.s32 1, %s2
  %s5 = scalar_select 0, %s4, %s2
  $region1: #{tpu_custom_call.1} parent=0
    #allocation2 [shape = 'u8[8192]{0}', space=vmem, size = 0x2000, scoped, tag = 'output window, operand 0, single buffered']
    #allocation3 [shape = 's32[1]{0}', space=sflag, size = 0x4, scoped, tag = 'scoped memory for tpu_custom_call.1']
    %6 = vsyncpa [#allocation3], 0
    // Predicated region
    $region2: #{tpu_custom_call.1} parent=1 // pred_check
      _
    $region3: #{tpu_custom_call.1} parent=1 // pred_check_branch
      %8 = sbr.rel (0) target = $region5
    $region4: #{tpu_custom_call.1} parent=1 // pred_region
      _
    $region5: #{tpu_custom_call.1} parent=1 // pred_fallthru
      _
    %v9 = vld [vmem:[%s0] sm:$0x1]
    %v10 = vld [vmem:[%s0 + $0x10] sm:$0x1]
    %v11 = vld [vmem:[%s0 + $0x1] sm:$0xff]
    %v12 = vld [vmem:[%s0 + $0x11] sm:$0xff]
    %v13 = vlaneseq
    %v14 = vshrl.u32 %v13, 7
    %v15 = vsub.s32 0, %v14
    %v16 = vrot.slane %v9, %v15
    %v17 = vlaneseq
    %v18 = vshrl.u32 %v17, 7
    %v19 = vsub.s32 0, %v18
    %v20 = vrot.slane %v10, %v19
    %v21 = vadd.f32 %v11, %v16
    %v22 = vadd.f32 %v12, %v20
    %vm23 = vcmask 261120
    %24 = vst.msk [vmem:[#allocation2] sm:$0xff] %vm23, %v21
    %25 = vst.msk [vmem:[#allocation2 + $0x8] sm:$0xff] %vm23, %v22
    // Predicated region
    $region6: #{tpu_custom_call.1} parent=1 // pred_check
      _
    $region7: #{tpu_custom_call.1} parent=1 // pred_check_branch
      %27 = sbr.rel (0) target = $region9
    $region8: #{tpu_custom_call.1} parent=1 // pred_region
      %s29 = ssub.s32 256, 256
      %30 = vsyncadd [#allocation3], %s29
      %s31 = sshll.u32 [#allocation2], 4
      %s32 = int_to_ptr.vmem [resolvable:$true] %s31
      %37 = dma.vmem_to_hbm [thread:$0]  %s32, 256, %s1, [#allocation3], 128, 128, 8
    $region9: #{tpu_custom_call.1} parent=1 // pred_fallthru
      _
    // Predicated region
    $region10: #{tpu_custom_call.1} parent=1 // pred_check
      _
    $region11: #{tpu_custom_call.1} parent=1 // pred_check_branch
      %39 = sbr.rel (0) target = $region13
    $region12: #{tpu_custom_call.1} parent=1 // pred_region
      %40 = dma.done [#allocation3], 256
    $region13: #{tpu_custom_call.1} parent=1 // pred_fallthru
      _
    %41 = vsyncpa [#allocation3], 1

</llo_original>
